<compile_context>
chip_gen: v5e
topology: v5e:2x2
jax: 0.10.0
libtpu: 0.0.40
codegen_flags: <defaults>
</compile_context>

<pallas_src>
import math
import functools

import jax
import jax.numpy as jnp
from jax import lax
from jax.experimental import pallas as pl
from jax.experimental.pallas import tpu as pltpu


# ---------------------------------------------------------------------------
# Parameter / buffer setup (deterministic, mirrors PyTorch __init__)
# ---------------------------------------------------------------------------
def make_pos_embedding(emb_size: int, maxlen: int = 5000) -> jnp.ndarray:
    den = jnp.exp(-jnp.arange(0, emb_size, 2, dtype=jnp.float32)
                  * math.log(10000.0) / emb_size)            # (emb_size//2,)
    pos = jnp.arange(0, maxlen, dtype=jnp.float32)[:, None]  # (maxlen, 1)
    pe = jnp.zeros((maxlen, emb_size), dtype=jnp.float32)
    pe = pe.at[:, 0::2].set(jnp.sin(pos * den))
    pe = pe.at[:, 1::2].set(jnp.cos(pos * den))
    return pe                                                # (maxlen, emb_size)


# ---------------------------------------------------------------------------
# Kernels
# ---------------------------------------------------------------------------
def pe_add_kernel(x_ref, pos_ref, o_ref):
    # x_ref: (TS, B, E)   pos_ref: (TS, E)   o_ref: (TS, B, E)
    x = x_ref[...]
    pe = pos_ref[...][:, None, :]              # broadcast over batch axis
    o_ref[...] = (x + pe).astype(o_ref.dtype)


def pe_add_dropout_kernel(x_ref, pos_ref, o_ref, *,
                          keep_threshold: int, scale: float, seed_mix: int):
    # Inverted dropout (PyTorch nn.Dropout in training mode): keep w.p. (1-rate),
    # scale kept values by 1/(1-rate).  Randomness = murmur3 fmix32 hash of the
    # global element index XOR seed; drop test is a direct uint32 threshold
    # compare (no float convert / multiply per element).
    y = x_ref[...] + pos_ref[...][:, None, :]
    ts, b, e = y.shape
    block_elems = ts * b * e

    s_i = lax.broadcasted_iota(jnp.int32, y.shape, 0)
    b_i = lax.broadcasted_iota(jnp.int32, y.shape, 1)
    e_i = lax.broadcasted_iota(jnp.int32, y.shape, 2)
    idx = pl.program_id(0) * block_elems + s_i * (b * e) + b_i * e + e_i

    z = idx.astype(jnp.uint32) ^ jnp.uint32(seed_mix)
    z = z ^ (z >> 16)
    z = z * jnp.uint32(0x85EBCA6B)
    z = z ^ (z >> 13)
    z = z * jnp.uint32(0xC2B2AE35)
    z = z ^ (z >> 16)

    keep = z >= jnp.uint32(keep_threshold)       # P(keep) = 1 - rate
    scl = jnp.asarray(scale, dtype=y.dtype)
    o_ref[...] = jnp.where(keep, y * scl, jnp.zeros_like(y)).astype(o_ref.dtype)


# ---------------------------------------------------------------------------
# Tiling helper: pick the largest VMEM-friendly seq tile (multiple of 8),
# targeting ~4 MiB of x per block so the grid-step overhead is amortized while
# double-buffered in/out blocks stay well inside scoped VMEM on all generations.
# ---------------------------------------------------------------------------
def _choose_seq_tile(S: int, B: int, E: int, itemsize: int,
                     target_bytes: int = 4 << 20) -> int:
    row_bytes = max(1, B * E * itemsize)
    ts = max(1, target_bytes // row_bytes)
    if ts >= S:
        # Whole array fits in one block: still split into 2 blocks when we can,
        # so both v7x TensorCores get work (parallel grid axis).
        if S >= 16:
            half = ((((S + 1) // 2) + 7) // 8) * 8
            if half < S:
                return half
        return S
    return max(8, (ts // 8) * 8)


# ---------------------------------------------------------------------------
# Wrapper
# ---------------------------------------------------------------------------
def positional_encoding(token_embedding: jnp.ndarray,
                        pos_embedding: jnp.ndarray,
                        *,
                        dropout: float = 0.1,
                        training: bool = False,
                        seed: int = 0) -> jnp.ndarray:
    """token_embedding: (S, B, E)   pos_embedding: (maxlen, E)."""
    S, B, E = token_embedding.shape
    dtype = token_embedding.dtype
    pos = pos_embedding[:S].astype(dtype)        # glue slice + dtype match

    TS = _choose_seq_tile(S, B, E, jnp.dtype(dtype).itemsize)
    grid = (pl.cdiv(S, TS),)

    x_spec = pl.BlockSpec((TS, B, E), lambda i: (i, 0, 0))
    p_spec = pl.BlockSpec((TS, E), lambda i: (i, 0))
    o_spec = pl.BlockSpec((TS, B, E), lambda i: (i, 0, 0))
    out_shape = jax.ShapeDtypeStruct((S, B, E), dtype)

    cparams = pltpu.CompilerParams(
        dimension_semantics=("parallel",),
        vmem_limit_bytes=48 * 1024 * 1024)

    if training and dropout > 0.0:
        rate = float(dropout)
        thr = min(int(round(rate * (1 << 32))), (1 << 32) - 1)
        seed_mix = (int(seed) * 0x9E3779B1) & 0xFFFFFFFF
        kernel = functools.partial(pe_add_dropout_kernel,
                                   keep_threshold=thr,
                                   scale=1.0 / (1.0 - rate),
                                   seed_mix=seed_mix)
        return pl.pallas_call(
            kernel,
            out_shape=out_shape,
            grid=grid,
            in_specs=[x_spec, p_spec],
            out_specs=o_spec,
            compiler_params=cparams,
        )(token_embedding, pos)

    # Eval mode: nn.Dropout is the identity.
    return pl.pallas_call(
        pe_add_kernel,
        out_shape=out_shape,
        grid=grid,
        in_specs=[x_spec, p_spec],
        out_specs=o_spec,
        compiler_params=cparams,
    )(token_embedding, pos)


# ---------------------------------------------------------------------------
# Demo / self-check
# ---------------------------------------------------------------------------
if __name__ == "__main__":
    seq_len, batch, emb_size, maxlen = 16, 8, 128, 64
    dropout_rate = 0.1

    key = jax.random.PRNGKey(0)
    x = jax.random.normal(key, (seq_len, batch, emb_size), dtype=jnp.float32)

    pos_embedding = make_pos_embedding(emb_size, maxlen)

    # Eval-mode (deterministic) forward — matches PyTorch module.eval().
    out_eval = positional_encoding(x, pos_embedding,
                                   dropout=dropout_rate, training=False)
    out_eval = jax.block_until_ready(out_eval)

    ref = x + pos_embedding[:seq_len][:, None, :]
    assert out_eval.shape == x.shape
    assert jnp.allclose(out_eval, ref, atol=1e-6), "eval-mode mismatch"

    # Training-mode forward (inverted dropout applied inside the kernel).
    # TODO(synk): mask differs bitwise from torch's RNG, but is the same
    # Bernoulli(1-p) inverted-dropout semantics.
    out_train = positional_encoding(x, pos_embedding,
                                    dropout=dropout_rate, training=True,
                                    seed=123)
    out_train = jax.block_until_ready(out_train)
    assert out_train.shape == x.shape
    kept = out_train != 0
    assert jnp.allclose(jnp.where(kept, out_train, 0.0),
                        jnp.where(kept, ref / (1.0 - dropout_rate), 0.0),
                        atol=1e-5), "training-mode scaling mismatch"
    drop_frac = 1.0 - float(jnp.mean(kept.astype(jnp.float32)))
    assert 0.02 <= drop_frac <= 0.25, "dropout fraction implausible"

    print("KERNEL_OK")
</pallas_src>

<mosaic_0001>
module attributes {stable_mosaic.version = 11 : i64} {
  func.func @pe_add_kernel(%arg0: i32, %arg1: memref<8x8x128xf32, #tpu.memory_space<vmem>>, %arg2: memref<8x128xf32, #tpu.memory_space<vmem>>, %arg3: memref<8x8x128xf32, #tpu.memory_space<vmem>>) attributes {dimension_semantics = [#tpu.dimension_semantics<parallel>], iteration_bounds = array<i64: 2>, scalar_prefetch = 0 : i64, scratch_operands = 0 : i64, tpu.core_type = #tpu.core_type<tc>, window_params = [{transform_indices = @transform_0, window_bounds = array<i64: 8, 8, 128>}, {transform_indices = @transform_1, window_bounds = array<i64: 8, 128>}, {transform_indices = @transform_2, window_bounds = array<i64: 8, 8, 128>}]} {
    %c0 = arith.constant 0 : index
    %c0_0 = arith.constant 0 : index
    %c0_1 = arith.constant 0 : index
    %0 = vector.load %arg1[%c0, %c0_0, %c0_1] : memref<8x8x128xf32, #tpu.memory_space<vmem>>, vector<8x8x128xf32>
    %c0_2 = arith.constant 0 : index
    %c0_3 = arith.constant 0 : index
    %1 = vector.load %arg2[%c0_2, %c0_3] : memref<8x128xf32, #tpu.memory_space<vmem>>, vector<8x128xf32>
    %2 = vector.shape_cast %1 : vector<8x128xf32> to vector<8x1x128xf32>
    %3 = vector.broadcast %2 : vector<8x1x128xf32> to vector<8x8x128xf32>
    %4 = arith.addf %0, %3 : vector<8x8x128xf32>
    %c0_4 = arith.constant 0 : index
    %c0_5 = arith.constant 0 : index
    %c0_6 = arith.constant 0 : index
    %5 = vector.load %arg3[%c0_4, %c0_5, %c0_6] : memref<8x8x128xf32, #tpu.memory_space<vmem>>, vector<8x8x128xf32>
    tpu.vector_store %arg3[%c0_4, %c0_5, %c0_6], %4 {strides = array<i32>} : memref<8x8x128xf32, #tpu.memory_space<vmem>>, vector<8x8x128xf32>,
    return
  }
  func.func @transform_0(%arg0: i32) -> (i32, i32, i32) {
    %c0_i32 = arith.constant 0 : i32
    %c0_i32_0 = arith.constant 0 : i32
    %c0_i32_1 = arith.constant 0 : i32
    return %arg0, %c0_i32, %c0_i32_0 : i32, i32, i32
  }
  func.func @transform_1(%arg0: i32) -> (i32, i32) {
    %c0_i32 = arith.constant 0 : i32
    %c0_i32_0 = arith.constant 0 : i32
    return %arg0, %c0_i32 : i32, i32
  }
  func.func @transform_2(%arg0: i32) -> (i32, i32, i32) {
    %c0_i32 = arith.constant 0 : i32
    %c0_i32_0 = arith.constant 0 : i32
    %c0_i32_1 = arith.constant 0 : i32
    return %arg0, %c0_i32, %c0_i32_0 : i32, i32, i32
  }
}

</mosaic_0001>

<llo_original>
// kernel: tpu_custom_call.1
$region0: #{tpu_custom_call.1}
  #allocation0 [shape = 'u32[]', space=smem, size = 0x4, offset = 0x4, fixed_abs, tag = 'smem constant byte address 0x4 - core index']
  #allocation1 [shape = 'u32[72,128]{1,0:T(1,128)}', space=vmem, size = 0x9000, scoped, tag = 'internal scratch']
  %s0 = inlined_call_operand.hbm [shape: f32[16,8,128], index: 0, kind: input, shape index: {}]
  %s1 = inlined_call_operand.hbm [shape: f32[16,128], index: 1, kind: input, shape index: {}]
  %s2 = inlined_call_operand.hbm [shape: f32[16,8,128], index: 2, kind: output, shape index: {}]
  %s3 = sld [smem:[#allocation0]]
  $region49: #{tpu_custom_call.1} parent=0
    _
  %s5 = ssub.s32 1, %s3
  %s6 = scalar_select 0, %s5, %s3
  $region1: #{tpu_custom_call.1} parent=0
    #allocation2 [shape = 'u8[65536]{0}', space=vmem, size = 0x10000, scoped, tag = 'input window, operand 0']
    #allocation3 [shape = 's32[2]{0}', space=sflag, size = 0x8, scoped, tag = 'scoped memory for tpu_custom_call.1']
    #allocation4 [shape = 's32[2]{0}', space=sflag, size = 0x8, scoped, tag = 'scoped memory for tpu_custom_call.1']
    #allocation5 [shape = 'u8[8192]{0}', space=vmem, size = 0x2000, scoped, tag = 'input window, operand 1']
    #allocation6 [shape = 's32[2]{0}', space=sflag, size = 0x8, scoped, tag = 'scoped memory for tpu_custom_call.1']
    #allocation7 [shape = 'u8[65536]{0}', space=vmem, size = 0x10000, scoped, tag = 'output window, operand 0']
    %7 = vsyncpa [#allocation3], 0
    %s8 = scalar_lea.sflag [#allocation3], 1
    %9 = vsyncpa %s8, 0
    %10 = vsyncpa [#allocation6], 0
    %s11 = scalar_lea.sflag [#allocation6], 1
    %12 = vsyncpa %s11, 0
    %13 = vsyncpa [#allocation4], 0
    %s14 = scalar_lea.sflag [#allocation4], 1
    %15 = vsyncpa %s14, 0
    loop: start=0, step=1, limit=4
    $region2: #{tpu_custom_call.1} parent=1 // loop_pre_header
      _
    $region3: #{tpu_custom_call.1} parent=1 // loop_header
      %s17 = sphi 0, %s21
      %p18 = scmp.ge.s32.totalorder %s17, 4
      %s27 = sphi 0, %s29
      %s30 = sphi 0, %s27
      %s31 = sphi 0, %s30
      %s47 = sphi 0, %s31
      %s53 = sphi 0, %s55
      %s56 = sphi 0, %s53
      %s57 = sphi 0, %s56
      %s73 = sphi 0, %s57
      %s79 = sphi 0, %s81
      %s82 = sphi 0, %s79
      %s83 = sphi 0, %s82
      %s99 = sphi 0, %s83
    $region4: #{tpu_custom_call.1} parent=1 // loop_header_branch
      %20 = sbr.rel (%p18) target = $region8
    $region5: #{tpu_custom_call.1} parent=1 // loop_body
      %s22 = ssub.s32 %s17, 1
      %s23 = ssub.s32 %s17, 2
      %s24 = sadd.s32 %s17, 1
      %s25 = ssub.s32 %s17, %s24
      %p26 = scmp.eq.s32.totalorder %s25, 0
      %s28 = sadd.s32 %s27, 1
      %s29 = scalar_select %p26, %s27, %s28
      %p32 = pneg %p26
      %p33 = scmp.eq.s32.totalorder %s17, 1
      %p34 = por %p32, %p33
      %p35 = scmp.ne.s32.totalorder %s27, %s30
      %p36 = scmp.eq.s32.totalorder %s17, 0
      %p37 = por %p35, %p36
      %p38 = scmp.ne.s32.totalorder %s27, %s30
      %p39 = scmp.eq.s32.totalorder %s22, 1
      %p40 = por %p38, %p39
      %p41 = scmp.ne.s32.totalorder %s30, %s31
      %p42 = scmp.eq.s32.totalorder %s22, 0
      %p43 = por %p41, %p42
      %p44 = scmp.ne.s32.totalorder %s30, %s31
      %p45 = scmp.eq.s32.totalorder %s23, 1
      %p46 = por %p44, %p45
      %p48 = scmp.ne.s32.totalorder %s31, %s47
      %p49 = scmp.eq.s32.totalorder %s23, 0
      %p50 = por %p48, %p49
      %s51 = ssub.s32 %s17, %s24
      %p52 = scmp.eq.s32.totalorder %s51, 0
      %s54 = sadd.s32 %s53, 1
      %s55 = scalar_select %p52, %s53, %s54
      %p58 = pneg %p52
      %p59 = scmp.eq.s32.totalorder %s17, 1
      %p60 = por %p58, %p59
      %p61 = scmp.ne.s32.totalorder %s53, %s56
      %p62 = scmp.eq.s32.totalorder %s17, 0
      %p63 = por %p61, %p62
      %p64 = scmp.ne.s32.totalorder %s53, %s56
      %p65 = scmp.eq.s32.totalorder %s22, 1
      %p66 = por %p64, %p65
      %p67 = scmp.ne.s32.totalorder %s56, %s57
      %p68 = scmp.eq.s32.totalorder %s22, 0
      %p69 = por %p67, %p68
      %p70 = scmp.ne.s32.totalorder %s56, %s57
      %p71 = scmp.eq.s32.totalorder %s23, 1
      %p72 = por %p70, %p71
      %p74 = scmp.ne.s32.totalorder %s57, %s73
      %p75 = scmp.eq.s32.totalorder %s23, 0
      %p76 = por %p74, %p75
      %s77 = ssub.s32 %s17, %s24
      %p78 = scmp.eq.s32.totalorder %s77, 0
      %s80 = sadd.s32 %s79, 1
      %s81 = scalar_select %p78, %s79, %s80
      %p84 = pneg %p78
      %p85 = scmp.eq.s32.totalorder %s17, 1
      %p86 = por %p84, %p85
      %p87 = scmp.ne.s32.totalorder %s79, %s82
      %p88 = scmp.eq.s32.totalorder %s17, 0
      %p89 = por %p87, %p88
      %p90 = scmp.ne.s32.totalorder %s79, %s82
      %p91 = scmp.eq.s32.totalorder %s22, 1
      %p92 = por %p90, %p91
      %p93 = scmp.ne.s32.totalorder %s82, %s83
      %p94 = scmp.eq.s32.totalorder %s22, 0
      %p95 = por %p93, %p94
      %p96 = scmp.ne.s32.totalorder %s82, %s83
      %p97 = scmp.eq.s32.totalorder %s23, 1
      %p98 = por %p96, %p97
      %p100 = scmp.ne.s32.totalorder %s83, %s99
      %p101 = scmp.eq.s32.totalorder %s23, 0
      %p102 = por %p100, %p101
      %p103 = scmp.le.s32.totalorder 1, %s17
      %p104 = scmp.lt.s32.totalorder %s17, 3
      %p105 = pnand %p103, %p104
      %p106 = pneg %p105
      // Predicated region
      $region9: #{tpu_custom_call.1} parent=5 // pred_check
        _
      $region10: #{tpu_custom_call.1} parent=5 // pred_check_branch
        %108 = sbr.rel (%p105) target = $region12
      $region11: #{tpu_custom_call.1} parent=5 // pred_region
        %s109 = ssub.s32 %s17, 1
      $region12: #{tpu_custom_call.1} parent=5 // pred_fallthru
        _
      %p110 = scmp.lt.s32.totalorder %s17, 2
      // Predicated region
      $region13: #{tpu_custom_call.1} parent=5 // pred_check
        %p111 = pneg %p110
      $region14: #{tpu_custom_call.1} parent=5 // pred_check_branch
        %113 = sbr.rel (%p111) target = $region16
      $region15: #{tpu_custom_call.1} parent=5 // pred_region
        // Predicated region
        $region17: #{tpu_custom_call.1} parent=15 // pred_check
          %p114 = pneg %p37
        $region18: #{tpu_custom_call.1} parent=15 // pred_check_branch
          %116 = sbr.rel (%p114) target = $region20
        $region19: #{tpu_custom_call.1} parent=15 // pred_region
          %s117 = sand.u32 %s27, 1
          %s118 = scalar_lea.sflag [#allocation3], %s117
          %s119 = sand.u32 %s27, 1
          %s120 = smul.addr %s119, 64
          %s121 = scalar_lea.vmem [#allocation2], %s120
          %s122 = smul.u32 8, %s17
          %124 = vsyncadd %s118, 0
          %s125 = smul.addr %s122, 8
          %s126 = scalar_lea.hbm %s0, %s125
          %s127 = sshll.u32 %s126, 4
          %s128 = int_to_ptr.hbm [resolvable:$true] %s127
          %s129 = sshll.u32 %s121, 4
          %s130 = int_to_ptr.vmem [resolvable:$true] %s129
          %135 = dma.hbm_to_vmem [thread:$0]  %s128, 1024, %s130, %s118, 128, 128, 8
        $region20: #{tpu_custom_call.1} parent=15 // pred_fallthru
          _
        // Predicated region
        $region21: #{tpu_custom_call.1} parent=15 // pred_check
          %p136 = pneg %p63
        $region22: #{tpu_custom_call.1} parent=15 // pred_check_branch
          %138 = sbr.rel (%p136) target = $region24
        $region23: #{tpu_custom_call.1} parent=15 // pred_region
          %s139 = sand.u32 %s53, 1
          %s140 = scalar_lea.sflag [#allocation6], %s139
          %s141 = sand.u32 %s53, 1
          %s142 = smul.addr %s141, 8
          %s143 = scalar_lea.vmem [#allocation5], %s142
          %145 = vsyncadd %s140, 0
          %s146 = smul.addr %s17, 8
          %s147 = scalar_lea.hbm %s1, %s146
          %s149 = sshll.u32 %s147, 4
          %s150 = int_to_ptr.hbm [resolvable:$true] %s149
          %s151 = sshll.u32 %s143, 4
          %s152 = int_to_ptr.vmem [resolvable:$true] %s151
          %154 = dma.hbm_to_vmem [thread:$0]  %s150, 128, %s152, %s140
        $region24: #{tpu_custom_call.1} parent=15 // pred_fallthru
          _
      $region16: #{tpu_custom_call.1} parent=5 // pred_fallthru
        _
      %p155 = scmp.le.s32.totalorder 1, %s17
      %p156 = scmp.lt.s32.totalorder %s17, 3
      %p157 = pnand %p155, %p156
      %p158 = pneg %p157
      // Predicated region
      $region25: #{tpu_custom_call.1} parent=5 // pred_check
        _
      $region26: #{tpu_custom_call.1} parent=5 // pred_check_branch
        %160 = sbr.rel (%p157) target = $region28
      $region27: #{tpu_custom_call.1} parent=5 // pred_region
        %s161 = ssub.s32 %s17, 1
        %s162 = sand.u32 %s30, 1
        %s163 = scalar_lea.sflag [#allocation3], %s162
        %s164 = sand.u32 %s30, 1
        %s165 = smul.addr %s164, 64
        %s166 = scalar_lea.vmem [#allocation2], %s165
        // Predicated region
        $region29: #{tpu_custom_call.1} parent=27 // pred_check
          %p167 = pneg %p43
        $region30: #{tpu_custom_call.1} parent=27 // pred_check_branch
          %169 = sbr.rel (%p167) target = $region32
        $region31: #{tpu_custom_call.1} parent=27 // pred_region
          %171 = dma.done %s163, 1024
        $region32: #{tpu_custom_call.1} parent=27 // pred_fallthru
          _
        %s172 = sand.u32 %s56, 1
        %s173 = scalar_lea.sflag [#allocation6], %s172
        %s174 = sand.u32 %s56, 1
        %s175 = smul.addr %s174, 8
        %s176 = scalar_lea.vmem [#allocation5], %s175
        // Predicated region
        $region33: #{tpu_custom_call.1} parent=27 // pred_check
          %p177 = pneg %p69
        $region34: #{tpu_custom_call.1} parent=27 // pred_check_branch
          %179 = sbr.rel (%p177) target = $region36
        $region35: #{tpu_custom_call.1} parent=27 // pred_region
          %181 = dma.done %s173, 128
        $region36: #{tpu_custom_call.1} parent=27 // pred_fallthru
          _
        %s182 = sand.u32 %s30, 1
        %s183 = scalar_lea.sflag [#allocation3], %s182
        %s184 = sand.u32 %s30, 1
        %s185 = smul.addr %s184, 64
        %s186 = scalar_lea.vmem [#allocation2], %s185
        %p187 = pneg %p43
        %p188 = pneg %p40
        %s189 = sand.u32 %s56, 1
        %s190 = scalar_lea.sflag [#allocation6], %s189
        %s191 = sand.u32 %s56, 1
        %s192 = smul.addr %s191, 8
        %s193 = scalar_lea.vmem [#allocation5], %s192
        %p194 = pneg %p69
        %p195 = pneg %p66
        %p196 = pneg %p95
        %p197 = pneg %p92
        %s198 = sand.u32 %s82, 1
        %s199 = scalar_lea.sflag [#allocation4], %s198
        %s200 = sand.u32 %s82, 1
        %s201 = smul.addr %s200, 64
        %s202 = scalar_lea.vmem [#allocation7], %s201
        %s203 = smul.u32 8, %s22
        %s204 = smul.u32 8, %s22
        %v205 = vld [vmem:[%s166] sm:$0xff]
        %v206 = vld [vmem:[%s166 + $0x8] sm:$0xff]
        %v207 = vld [vmem:[%s166 + $0x10] sm:$0xff]
        %v208 = vld [vmem:[%s166 + $0x18] sm:$0xff]
        %v209 = vld [vmem:[%s166 + $0x20] sm:$0xff]
        %v210 = vld [vmem:[%s166 + $0x28] sm:$0xff]
        %v211 = vld [vmem:[%s166 + $0x30] sm:$0xff]
        %v212 = vld [vmem:[%s166 + $0x38] sm:$0xff]
        %v213 = vld [vmem:[%s176] sm:$0xff]
        %v215 = vrot.slane %v213, 1
        %v216 = vrot.slane %v213, 2
        %v217 = vrot.slane %v213, 3
        %v218 = vrot.slane %v213, 4
        %v219 = vrot.slane %v213, 5
        %v220 = vrot.slane %v213, 6
        %v221 = vrot.slane %v213, 7
        %v222 = vperm.slane %v213, 0
        %v223 = vperm.slane %v215, 0
        %v224 = vperm.slane %v216, 0
        %v225 = vperm.slane %v217, 0
        %v226 = vperm.slane %v218, 0
        %v227 = vperm.slane %v219, 0
        %v228 = vperm.slane %v220, 0
        %v229 = vperm.slane %v221, 0
        %v238 = vadd.f32 %v205, %v222
        %v239 = vadd.f32 %v206, %v223
        %v240 = vadd.f32 %v207, %v224
        %v241 = vadd.f32 %v208, %v225
        %v242 = vadd.f32 %v209, %v226
        %v243 = vadd.f32 %v210, %v227
        %v244 = vadd.f32 %v211, %v228
        %v245 = vadd.f32 %v212, %v229
        %246 = vst [vmem:[%s202] sm:$0xff] %v238
        %247 = vst [vmem:[%s202 + $0x8] sm:$0xff] %v239
        %248 = vst [vmem:[%s202 + $0x10] sm:$0xff] %v240
        %249 = vst [vmem:[%s202 + $0x18] sm:$0xff] %v241
        %250 = vst [vmem:[%s202 + $0x20] sm:$0xff] %v242
        %251 = vst [vmem:[%s202 + $0x28] sm:$0xff] %v243
        %252 = vst [vmem:[%s202 + $0x30] sm:$0xff] %v244
        %253 = vst [vmem:[%s202 + $0x38] sm:$0xff] %v245
        %s254 = sand.u32 %s82, 1
        %s255 = scalar_lea.sflag [#allocation4], %s254
        %s256 = sand.u32 %s82, 1
        %s257 = smul.addr %s256, 64
        %s258 = scalar_lea.vmem [#allocation7], %s257
        // Predicated region
        $region37: #{tpu_custom_call.1} parent=27 // pred_check
          %p259 = pneg %p92
        $region38: #{tpu_custom_call.1} parent=27 // pred_check_branch
          %261 = sbr.rel (%p259) target = $region40
        $region39: #{tpu_custom_call.1} parent=27 // pred_region
          %s262 = smul.u32 8, %s22
          %264 = vsyncadd %s255, 0
          %s265 = smul.addr %s262, 8
          %s266 = scalar_lea.hbm %s2, %s265
          %s267 = sshll.u32 %s258, 4
          %s268 = int_to_ptr.vmem [resolvable:$true] %s267
          %s269 = sshll.u32 %s266, 4
          %s270 = int_to_ptr.hbm [resolvable:$true] %s269
          %275 = dma.vmem_to_hbm [thread:$0]  %s268, 1024, %s270, %s255, 128, 128, 8
        $region40: #{tpu_custom_call.1} parent=27 // pred_fallthru
          _
      $region28: #{tpu_custom_call.1} parent=5 // pred_fallthru
        _
      %p276 = scmp.le.s32.totalorder 2, %s17
      // Predicated region
      $region41: #{tpu_custom_call.1} parent=5 // pred_check
        %p277 = pneg %p276
      $region42: #{tpu_custom_call.1} parent=5 // pred_check_branch
        %279 = sbr.rel (%p277) target = $region44
      $region43: #{tpu_custom_call.1} parent=5 // pred_region
        %s280 = ssub.s32 %s17, 2
        // Predicated region
        $region45: #{tpu_custom_call.1} parent=43 // pred_check
          %p281 = pneg %p98
        $region46: #{tpu_custom_call.1} parent=43 // pred_check_branch
          %283 = sbr.rel (%p281) target = $region48
        $region47: #{tpu_custom_call.1} parent=43 // pred_region
          %s284 = sand.u32 %s83, 1
          %s285 = scalar_lea.sflag [#allocation4], %s284
          %s286 = sand.u32 %s83, 1
          %s287 = smul.addr %s286, 64
          %s288 = scalar_lea.vmem [#allocation7], %s287
          %290 = dma.done %s285, 1024
        $region48: #{tpu_custom_call.1} parent=43 // pred_fallthru
          _
      $region44: #{tpu_custom_call.1} parent=5 // pred_fallthru
        _
    $region6: #{tpu_custom_call.1} parent=1 // loop_footer
      %s21 = sadd.s32 1, %s17
    $region7: #{tpu_custom_call.1} parent=1 // loop_footer_branch
      %16 = sbr.rel target = $region3
    $region8: #{tpu_custom_call.1} parent=1 // loop_exit
      _
    %291 = vsyncpa [#allocation3], 1
    %s292 = scalar_lea.sflag [#allocation3], 1
    %293 = vsyncpa %s292, 1
    %294 = vsyncpa [#allocation6], 1
    %s295 = scalar_lea.sflag [#allocation6], 1
    %296 = vsyncpa %s295, 1
    %297 = vsyncpa [#allocation4], 1
    %s298 = scalar_lea.sflag [#allocation4], 1
    %299 = vsyncpa %s298, 1

</llo_original>
